<compile_context>
chip_gen: v6e
topology: v6e:2x2x1
jax: 0.10.0
libtpu: 0.0.40
codegen_flags: <defaults>
</compile_context>

<pallas_src>
import jax
import jax.numpy as jnp
from jax.experimental import pallas as pl
from jax.experimental.pallas import tpu as pltpu


def receiver_kernel(x_ref, msg_ref, mask_ref, wlT_ref, wf_ref, bf_ref, out_ref):
    """One grid step processes a block of BB graphs.

    x_ref    : (1, BB, C, F) bf16  node features (graph-major, pure reshape of input)
    msg_ref  : (BB, H)       bf16  one message per graph
    mask_ref : (1, BB, C)    f32   candidate mask
    wlT_ref  : (E, F)        f32   `self.layer` weight, pre-transposed (linear stand-in)
    wf_ref   : (H, E)        f32   `self.fc` weight
    bf_ref   : (1, E)        f32   `self.fc` bias
    out_ref  : (1, C, BB)    f32   masked log-probabilities (lane axis = BB)
    """
    # message = self.fc(message): (BB,H) x (H,E), f32 accumulation.
    m = jnp.dot(msg_ref[...].astype(jnp.float32), wf_ref[...],
                preferred_element_type=jnp.float32) + bf_ref[...]            # (BB, E)

    # Reassociation (exact for the linear layer stand-in; the per-graph
    # b_layer . m[b] constant cancels in log_softmax):
    #   dots[b,c] = x[b,c,:] . (W_layer @ m[b]) = x[b,c,:] . u[b,:]
    u = jnp.dot(m, wlT_ref[...], preferred_element_type=jnp.float32)         # (BB, F)

    x = x_ref[0].astype(jnp.float32)                                         # (BB, C, F)
    dots = jnp.sum(x * u[:, None, :], axis=-1)                               # (BB, C)

    # log_softmax over candidates (torch dim=1 == last axis C here), all f32.
    mx = jnp.max(dots, axis=-1, keepdims=True)
    shifted = dots - mx
    lse = jnp.log(jnp.sum(jnp.exp(shifted), axis=-1, keepdims=True))
    logp = shifted - lse                                                     # (BB, C)

    masked = logp - (1.0 - mask_ref[0]) * 100000.0                           # (BB, C)

    # Only the tiny (BB, C) tile is transposed (XLU) so the store over the graph
    # axis BB stays lane-dense; the huge x stream was never transposed.
    out_ref[0] = masked.T                                                    # (C, BB)


def _choose_block_graphs(B, C, F, itemsize=2, x_buffer_budget=4 << 20):
    """Pick (BB, G): graphs per grid step and number of grid steps.

    Small-batch path (B <= 128): a single step with BB rounded up to a sublane
    multiple -- masked lane stores on the tiny output beat up-to-64x padded x
    traffic/compute.
    Large-batch path: BB is a multiple of 128 (lane-dense output stores), sized by
    a per-buffer byte budget so the double-buffered x block is a few MiB (amortizes
    the ~0.35 us/step overhead), and capped at ceil(B/2) so the "parallel" grid
    axis has >= 2 steps and both v7x TensorCores get work.
    """
    if B <= 128:
        return -(-B // 8) * 8, 1
    lane_f = -(-max(F, 128) // 128) * 128
    sub_c = -(-max(C, 16) // 16) * 16          # bf16 sublane packing of the (C,F) tile
    bytes_per_graph = sub_c * lane_f * itemsize
    bb_cap = max(128, (x_buffer_budget // bytes_per_graph) // 128 * 128)
    half_graphs = -(-B // 2)
    half_cap = max(128, -(-half_graphs // 128) * 128)
    bb = max(128, min(bb_cap, half_cap))
    g = -(-B // bb)
    return bb, g


def _vmem_limit_bytes(BB, C, F, H, E):
    """Conservative in-flight VMEM estimate (double-buffered streams + resident
    weights), clamped to [32 MiB, 48 MiB]: above v5e's 16 MiB scoped default and
    safely under v7x's 64 MiB physical VMEM per TensorCore."""
    lane = lambda n: -(-max(n, 1) // 128) * 128
    sub8 = lambda n: -(-max(n, 1) // 8) * 8
    sub16 = lambda n: -(-max(n, 1) // 16) * 16
    x_blk = BB * sub16(C) * lane(F) * 2                       # bf16
    msg_blk = sub16(BB) * lane(H) * 2                         # bf16
    mask_blk = sub8(BB) * lane(C) * 4                         # f32
    out_blk = sub8(C) * lane(BB) * 4                          # f32
    weights = (sub8(E) * lane(F) + sub8(H) * lane(E) + 8 * lane(E)) * 4
    est = 2 * (x_blk + msg_blk + mask_blk + out_blk + weights)
    return int(min(48 << 20, max(32 << 20, 3 * est)))


def receiver_forward(x, message, mask, w_layer, b_layer, w_fc, b_fc):
    """x: (B,C,F) f32, message: (B,H) f32, mask: (B,C) f32 -> (B,C) f32 log-probs."""
    B, C, F = x.shape
    H = message.shape[-1]
    E = w_layer.shape[-1]
    # b_layer contributes a per-graph constant to the pre-softmax logits and cancels
    # exactly in log_softmax, so it never needs to reach the kernel.
    del b_layer

    BB, G = _choose_block_graphs(B, C, F, itemsize=2)
    B_pad = G * BB
    if B_pad != B:
        pad = B_pad - B
        x = jnp.pad(x, ((0, pad), (0, 0), (0, 0)))
        message = jnp.pad(message, ((0, pad), (0, 0)))
        mask = jnp.pad(mask, ((0, pad), (0, 0)))

    # Streamed inputs in bf16 (halves HBM bytes for the dominant stream; ideally the
    # caller already supplies bf16 activations).  All kernel arithmetic stays f32.
    x_b = x.reshape(G, BB, C, F).astype(jnp.bfloat16)   # pure reshape: no HBM transpose
    msg_b = message.astype(jnp.bfloat16)
    mask_b = mask.reshape(G, BB, C)
    wlT = jnp.transpose(w_layer)                        # (E, F), resident in VMEM
    bf2 = b_fc.reshape(1, E)

    out = pl.pallas_call(
        receiver_kernel,
        out_shape=jax.ShapeDtypeStruct((G, C, BB), jnp.float32),
        grid_spec=pltpu.PrefetchScalarGridSpec(
            num_scalar_prefetch=0,
            grid=(G,),
            in_specs=[
                pl.BlockSpec((1, BB, C, F), lambda i: (i, 0, 0, 0)),  # x (graph-major)
                pl.BlockSpec((BB, H), lambda i: (i, 0)),              # messages
                pl.BlockSpec((1, BB, C), lambda i: (i, 0, 0)),        # mask
                pl.BlockSpec((E, F), lambda i: (0, 0)),               # layer weight^T (resident)
                pl.BlockSpec((H, E), lambda i: (0, 0)),               # fc weight (resident)
                pl.BlockSpec((1, E), lambda i: (0, 0)),               # fc bias (resident)
            ],
            out_specs=pl.BlockSpec((1, C, BB), lambda i: (i, 0, 0)),
        ),
        compiler_params=pltpu.CompilerParams(
            dimension_semantics=("parallel",),          # shards grid steps across v7x TCs
            vmem_limit_bytes=_vmem_limit_bytes(BB, C, F, H, E)),
    )(x_b, msg_b, mask_b, wlT, w_fc, bf2)

    # Undo the candidate-major OUTPUT layout (tiny: B_pad*C elements) and drop padding.
    return jnp.transpose(out, (0, 2, 1)).reshape(B_pad, C)[:B]


def receiver_reference(x, message, mask, w_layer, b_layer, w_fc, b_fc):
    """Pure-JAX reference with the original (non-reassociated) computation order."""
    emb = jnp.einsum("bcf,fe->bce", x, w_layer) + b_layer          # (B,C,E)
    m = message @ w_fc + b_fc                                      # (B,E)
    dots = jnp.einsum("bce,be->bc", emb, m)                        # (B,C)
    logp = jax.nn.log_softmax(dots, axis=1)
    return logp - (1.0 - mask) * 100000.0


if __name__ == "__main__":
    # Small shapes consistent with the module.
    B = 2            # data.num_graphs (batch_size)
    C = 8            # num_candidates = nodes per graph (embeddings.size(0) // batch_size)
    F = 16           # num_node_features
    E = 32           # opts.embedding_size
    H = 32           # opts.hidden_size
    DISTRACTORS = 3  # opts.distractors -> distractors + 1 candidates are unmasked

    key = jax.random.PRNGKey(0)
    kx, km, kwl, kbl, kwf, kbf, kidx = jax.random.split(key, 7)

    x = jax.random.normal(kx, (B, C, F), dtype=jnp.float32)
    message = jax.random.normal(km, (B, H), dtype=jnp.float32)

    # Deterministic parameter init (synthetic, no checkpoint).
    w_layer = jax.random.normal(kwl, (F, E), dtype=jnp.float32) * 0.1
    b_layer = jax.random.normal(kbl, (E,), dtype=jnp.float32) * 0.01
    w_fc = jax.random.normal(kwf, (H, E), dtype=jnp.float32) * 0.1
    b_fc = jax.random.normal(kbf, (E,), dtype=jnp.float32) * 0.01

    # select_distractors -> flat indices into (B*C); mask[indices] = 1
    idx_keys = jax.random.split(kidx, B)
    per_graph = [jax.random.permutation(idx_keys[b], C)[: DISTRACTORS + 1] + b * C
                 for b in range(B)]
    indices = jnp.concatenate(per_graph)
    mask = jnp.zeros((B * C,), dtype=jnp.float32).at[indices].set(1.0).reshape(B, C)

    out = receiver_forward(x, message, mask, w_layer, b_layer, w_fc, b_fc)
    out = jax.block_until_ready(out)
    assert out.shape == (B, C)
    assert bool(jnp.all(jnp.isfinite(out)))

    # 1) Same-precision check: reference fed the same bf16-quantized streamed inputs
    #    (isolates the reassociation / kernel math, which should match tightly).
    xq = x.astype(jnp.bfloat16).astype(jnp.float32)
    mq = message.astype(jnp.bfloat16).astype(jnp.float32)
    ref_q = receiver_reference(xq, mq, mask, w_layer, b_layer, w_fc, b_fc)
    assert jnp.allclose(out, ref_q, rtol=2e-3, atol=2e-3), "mismatch vs bf16-input reference"

    # 2) Fidelity vs the full-f32 module; the gap is bounded by bf16 input quantization.
    ref = receiver_reference(x, message, mask, w_layer, b_layer, w_fc, b_fc)
    assert jnp.allclose(out, ref, rtol=5e-2, atol=5e-2), "mismatch vs f32 reference"

    print("KERNEL_OK")
</pallas_src>

<mosaic_0001>
module attributes {stable_mosaic.version = 11 : i64} {
  func.func @receiver_kernel(%arg0: i32, %arg1: memref<1x8x8x16xbf16, #tpu.memory_space<vmem>>, %arg2: memref<8x32xbf16, #tpu.memory_space<vmem>>, %arg3: memref<1x8x8xf32, #tpu.memory_space<vmem>>, %arg4: memref<32x16xf32, #tpu.memory_space<vmem>>, %arg5: memref<32x32xf32, #tpu.memory_space<vmem>>, %arg6: memref<1x32xf32, #tpu.memory_space<vmem>>, %arg7: memref<1x8x8xf32, #tpu.memory_space<vmem>>) attributes {dimension_semantics = [#tpu.dimension_semantics<parallel>], iteration_bounds = array<i64: 1>, scalar_prefetch = 0 : i64, scratch_operands = 0 : i64, tpu.core_type = #tpu.core_type<tc>, window_params = [{transform_indices = @transform_0, window_bounds = array<i64: 1, 8, 8, 16>}, {transform_indices = @transform_1, window_bounds = array<i64: 8, 32>}, {transform_indices = @transform_2, window_bounds = array<i64: 1, 8, 8>}, {pipeline_mode = #tpu.pipeline_mode<synchronous>, transform_indices = @transform_3, window_bounds = array<i64: 32, 16>}, {pipeline_mode = #tpu.pipeline_mode<synchronous>, transform_indices = @transform_4, window_bounds = array<i64: 32, 32>}, {pipeline_mode = #tpu.pipeline_mode<synchronous>, transform_indices = @transform_5, window_bounds = array<i64: 1, 32>}, {transform_indices = @transform_6, window_bounds = array<i64: 1, 8, 8>}]} {
    %c0 = arith.constant 0 : index
    %c0_0 = arith.constant 0 : index
    %0 = vector.load %arg2[%c0, %c0_0] : memref<8x32xbf16, #tpu.memory_space<vmem>>, vector<8x32xbf16>
    %1 = arith.extf %0 : vector<8x32xbf16> to vector<8x32xf32>
    %c0_1 = arith.constant 0 : index
    %c0_2 = arith.constant 0 : index
    %2 = vector.load %arg5[%c0_1, %c0_2] : memref<32x32xf32, #tpu.memory_space<vmem>>, vector<32x32xf32>
    %cst = arith.constant dense<0.000000e+00> : vector<8x32xf32>
    %3 = tpu.matmul %1, %2, %cst {dimension_numbers = #tpu.dot_dimension_numbers<[1], [0], [0], [1], [0, 0, 1, 1], [], []>} : vector<8x32xf32>, vector<32x32xf32>, vector<8x32xf32> -> vector<8x32xf32>
    %c0_3 = arith.constant 0 : index
    %c0_4 = arith.constant 0 : index
    %4 = vector.load %arg6[%c0_3, %c0_4] : memref<1x32xf32, #tpu.memory_space<vmem>>, vector<1x32xf32>
    %5 = vector.broadcast %4 : vector<1x32xf32> to vector<8x32xf32>
    %6 = arith.addf %3, %5 : vector<8x32xf32>
    %c0_5 = arith.constant 0 : index
    %c0_6 = arith.constant 0 : index
    %7 = vector.load %arg4[%c0_5, %c0_6] : memref<32x16xf32, #tpu.memory_space<vmem>>, vector<32x16xf32>
    %cst_7 = arith.constant dense<0.000000e+00> : vector<8x16xf32>
    %8 = tpu.matmul %6, %7, %cst_7 {dimension_numbers = #tpu.dot_dimension_numbers<[1], [0], [0], [1], [0, 0, 1, 1], [], []>} : vector<8x32xf32>, vector<32x16xf32>, vector<8x16xf32> -> vector<8x16xf32>
    %c0_8 = arith.constant 0 : index
    %c0_9 = arith.constant 0 : index
    %c0_10 = arith.constant 0 : index
    %c0_11 = arith.constant 0 : index
    %9 = vector.load %arg1[%c0_8, %c0_9, %c0_10, %c0_11] : memref<1x8x8x16xbf16, #tpu.memory_space<vmem>>, vector<1x8x8x16xbf16>
    %10 = vector.shape_cast %9 : vector<1x8x8x16xbf16> to vector<8x8x16xbf16>
    %11 = arith.extf %10 : vector<8x8x16xbf16> to vector<8x8x16xf32>
    %12 = vector.shape_cast %8 : vector<8x16xf32> to vector<8x1x16xf32>
    %13 = vector.broadcast %12 : vector<8x1x16xf32> to vector<8x8x16xf32>
    %14 = arith.mulf %11, %13 : vector<8x8x16xf32>
    %cst_12 = arith.constant dense<0.000000e+00> : vector<8x8xf32>
    %15 = vector.multi_reduction <add>, %14, %cst_12 [2] : vector<8x8x16xf32> to vector<8x8xf32>
    %cst_13 = arith.constant dense<0xFF800000> : vector<8xf32>
    %16 = vector.multi_reduction <maximumf>, %15, %cst_13 [1] : vector<8x8xf32> to vector<8xf32>
    %17 = vector.shape_cast %16 : vector<8xf32> to vector<8x1xf32>
    %18 = vector.broadcast %17 : vector<8x1xf32> to vector<8x8xf32>
    %19 = arith.subf %15, %18 : vector<8x8xf32>
    %20 = math.exp %19 : vector<8x8xf32>
    %cst_14 = arith.constant dense<0.000000e+00> : vector<8xf32>
    %21 = vector.multi_reduction <add>, %20, %cst_14 [1] : vector<8x8xf32> to vector<8xf32>
    %22 = vector.shape_cast %21 : vector<8xf32> to vector<8x1xf32>
    %23 = math.log %22 : vector<8x1xf32>
    %24 = vector.broadcast %23 : vector<8x1xf32> to vector<8x8xf32>
    %25 = arith.subf %19, %24 : vector<8x8xf32>
    %c0_15 = arith.constant 0 : index
    %c0_16 = arith.constant 0 : index
    %c0_17 = arith.constant 0 : index
    %26 = vector.load %arg3[%c0_15, %c0_16, %c0_17] : memref<1x8x8xf32, #tpu.memory_space<vmem>>, vector<1x8x8xf32>
    %27 = vector.shape_cast %26 : vector<1x8x8xf32> to vector<8x8xf32>
    %cst_18 = arith.constant 1.000000e+00 : f32
    %28 = vector.broadcast %cst_18 : f32 to vector<8x8xf32>
    %29 = arith.subf %28, %27 : vector<8x8xf32>
    %cst_19 = arith.constant 1.000000e+05 : f32
    %30 = vector.broadcast %cst_19 : f32 to vector<8x8xf32>
    %31 = arith.mulf %29, %30 : vector<8x8xf32>
    %32 = arith.subf %25, %31 : vector<8x8xf32>
    %33 = tpu.transpose %32, [1, 0] : vector<8x8xf32> -> vector<8x8xf32>
    %c0_20 = arith.constant 0 : index
    %c0_21 = arith.constant 0 : index
    %c0_22 = arith.constant 0 : index
    %34 = vector.load %arg7[%c0_20, %c0_21, %c0_22] : memref<1x8x8xf32, #tpu.memory_space<vmem>>, vector<1x8x8xf32>
    %35 = vector.shape_cast %34 : vector<1x8x8xf32> to vector<8x8xf32>
    %36 = vector.shape_cast %33 : vector<8x8xf32> to vector<1x8x8xf32>
    tpu.vector_store %arg7[%c0_20, %c0_21, %c0_22], %36 {strides = array<i32>} : memref<1x8x8xf32, #tpu.memory_space<vmem>>, vector<1x8x8xf32>,
    return
  }
  func.func @transform_0(%arg0: i32) -> (i32, i32, i32, i32) {
    %c0_i32 = arith.constant 0 : i32
    %c0_i32_0 = arith.constant 0 : i32
    %c0_i32_1 = arith.constant 0 : i32
    %c0_i32_2 = arith.constant 0 : i32
    return %arg0, %c0_i32, %c0_i32_0, %c0_i32_1 : i32, i32, i32, i32
  }
  func.func @transform_1(%arg0: i32) -> (i32, i32) {
    %c0_i32 = arith.constant 0 : i32
    %c0_i32_0 = arith.constant 0 : i32
    return %arg0, %c0_i32 : i32, i32
  }
  func.func @transform_2(%arg0: i32) -> (i32, i32, i32) {
    %c0_i32 = arith.constant 0 : i32
    %c0_i32_0 = arith.constant 0 : i32
    %c0_i32_1 = arith.constant 0 : i32
    return %arg0, %c0_i32, %c0_i32_0 : i32, i32, i32
  }
  func.func @transform_3(%arg0: i32) -> (i32, i32) {
    %c0_i32 = arith.constant 0 : i32
    %c0_i32_0 = arith.constant 0 : i32
    %c0_i32_1 = arith.constant 0 : i32
    return %c0_i32, %c0_i32_0 : i32, i32
  }
  func.func @transform_4(%arg0: i32) -> (i32, i32) {
    %c0_i32 = arith.constant 0 : i32
    %c0_i32_0 = arith.constant 0 : i32
    %c0_i32_1 = arith.constant 0 : i32
    return %c0_i32, %c0_i32_0 : i32, i32
  }
  func.func @transform_5(%arg0: i32) -> (i32, i32) {
    %c0_i32 = arith.constant 0 : i32
    %c0_i32_0 = arith.constant 0 : i32
    %c0_i32_1 = arith.constant 0 : i32
    return %c0_i32, %c0_i32_0 : i32, i32
  }
  func.func @transform_6(%arg0: i32) -> (i32, i32, i32) {
    %c0_i32 = arith.constant 0 : i32
    %c0_i32_0 = arith.constant 0 : i32
    %c0_i32_1 = arith.constant 0 : i32
    return %arg0, %c0_i32, %c0_i32_0 : i32, i32, i32
  }
}

</mosaic_0001>

<llo_original>
// kernel: tpu_custom_call.1
$region0: #{tpu_custom_call.1}
  #allocation0 [shape = 'u32[]', space=smem, size = 0x4, offset = 0x4, fixed_abs, tag = 'smem constant byte address 0x4 - core index']
  #allocation1 [shape = 'u32[144,128]{1,0:T(1,128)}', space=vmem, size = 0x12000, scoped, tag = 'internal scratch']
  %s0 = inlined_call_operand.vmem [shape: bf16[1,8,8,16], index: 0, kind: input, shape index: {}]
  %s1 = inlined_call_operand.vmem [shape: bf16[8,32], index: 1, kind: input, shape index: {}]
  %s2 = inlined_call_operand.vmem [shape: f32[1,8,8], index: 2, kind: input, shape index: {}]
  %s3 = inlined_call_operand.vmem [shape: f32[32,16], index: 3, kind: input, shape index: {}]
  %s4 = inlined_call_operand.hbm [shape: f32[32,32], index: 4, kind: input, shape index: {}]
  %s5 = inlined_call_operand.vmem [shape: f32[1,32], index: 5, kind: input, shape index: {}]
  %s6 = inlined_call_operand.hbm [shape: f32[1,8,8], index: 6, kind: output, shape index: {}]
  %s7 = sld [smem:[#allocation0]]
  $region38: #{tpu_custom_call.1} parent=0
    _
  %s9 = ssub.s32 1, %s7
  %s10 = scalar_select 0, %s9, %s7
  $region1: #{tpu_custom_call.1} parent=0
    #allocation2 [shape = 'u8[16384]{0}', space=vmem, size = 0x4000, scoped, tag = 'input window, operand 4, single buffered']
    #allocation3 [shape = 's32[1]{0}', space=sflag, size = 0x4, scoped, tag = 'scoped memory for tpu_custom_call.1']
    #allocation4 [shape = 's32[1]{0}', space=sflag, size = 0x4, scoped, tag = 'scoped memory for tpu_custom_call.1']
    #allocation5 [shape = 'u8[4096]{0}', space=vmem, size = 0x1000, scoped, tag = 'output window, operand 0, single buffered']
    %11 = vsyncpa [#allocation3], 0
    %12 = vsyncpa [#allocation4], 0
    // Predicated region
    $region2: #{tpu_custom_call.1} parent=1 // pred_check
      _
    $region3: #{tpu_custom_call.1} parent=1 // pred_check_branch
      %14 = sbr.rel (0) target = $region5
    $region4: #{tpu_custom_call.1} parent=1 // pred_region
      _
    $region5: #{tpu_custom_call.1} parent=1 // pred_fallthru
      _
    // Predicated region
    $region6: #{tpu_custom_call.1} parent=1 // pred_check
      _
    $region7: #{tpu_custom_call.1} parent=1 // pred_check_branch
      %16 = sbr.rel (0) target = $region9
    $region8: #{tpu_custom_call.1} parent=1 // pred_region
      _
    $region9: #{tpu_custom_call.1} parent=1 // pred_fallthru
      _
    // Predicated region
    $region10: #{tpu_custom_call.1} parent=1 // pred_check
      _
    $region11: #{tpu_custom_call.1} parent=1 // pred_check_branch
      %18 = sbr.rel (0) target = $region13
    $region12: #{tpu_custom_call.1} parent=1 // pred_region
      _
    $region13: #{tpu_custom_call.1} parent=1 // pred_fallthru
      _
    // Predicated region
    $region14: #{tpu_custom_call.1} parent=1 // pred_check
      _
    $region15: #{tpu_custom_call.1} parent=1 // pred_check_branch
      %20 = sbr.rel (0) target = $region17
    $region16: #{tpu_custom_call.1} parent=1 // pred_region
      _
    $region17: #{tpu_custom_call.1} parent=1 // pred_fallthru
      _
    // Predicated region
    $region18: #{tpu_custom_call.1} parent=1 // pred_check
      _
    $region19: #{tpu_custom_call.1} parent=1 // pred_check_branch
      %22 = sbr.rel (0) target = $region21
    $region20: #{tpu_custom_call.1} parent=1 // pred_region
      %s24 = ssub.s32 512, 512
      %25 = vsyncadd [#allocation3], %s24
      %s26 = sshll.u32 [#allocation2], 4
      %s27 = int_to_ptr.vmem [resolvable:$true] %s26
      %32 = dma.hbm_to_vmem [thread:$0]  %s4, 512, %s27, [#allocation3], 128, 128, 8
    $region21: #{tpu_custom_call.1} parent=1 // pred_fallthru
      _
    // Predicated region
    $region22: #{tpu_custom_call.1} parent=1 // pred_check
      _
    $region23: #{tpu_custom_call.1} parent=1 // pred_check_branch
      %34 = sbr.rel (0) target = $region25
    $region24: #{tpu_custom_call.1} parent=1 // pred_region
      _
    $region25: #{tpu_custom_call.1} parent=1 // pred_fallthru
      _
    // Predicated region
    $region26: #{tpu_custom_call.1} parent=1 // pred_check
      _
    $region27: #{tpu_custom_call.1} parent=1 // pred_check_branch
      %36 = sbr.rel (0) target = $region29
    $region28: #{tpu_custom_call.1} parent=1 // pred_region
      %37 = dma.done [#allocation3], 512
    $region29: #{tpu_custom_call.1} parent=1 // pred_fallthru
      _
    %v38 = vld [vmem:[%s1] sm:$0xf]
    %v39 = vunpack.c.l.bf16 %v38
    %v40 = vld [vmem:[#allocation2] sm:$0xff]
    %v41 = vld [vmem:[#allocation2 + $0x8] sm:$0xff]
    %v42 = vld [vmem:[#allocation2 + $0x10] sm:$0xff]
    %v43 = vld [vmem:[#allocation2 + $0x18] sm:$0xff]
    %v44 = vld [vmem:[%s5] sm:$0x1]
    %v46 = vlaneseq
    %v47 = vshrl.u32 %v46, 7
    %v48 = vsub.s32 0, %v47
    %v49 = vrot.slane %v44, %v48
    %vm51 = vcmask 261120
    %v53 = vsel %vm51, %v39, 0
    %55 = vmatprep.subr.mxu0 0.0
    %56 = vmatpush1.msra.mxu0 0.0
    %57 = vmatprep.subr.mxu0 0.0
    %58 = vmatpush1.msra.mxu0 0.0
    %59 = vmatprep.subr.mxu0 0.0
    %60 = vmatpush1.msra.mxu0 0.0
    %61 = vmatprep.subr.mxu0 0.0
    %62 = vmatpush1.msra.mxu0 0.0
    %63 = vmatprep.subr.mxu0 0.0
    %64 = vmatpush1.msra.mxu0 0.0
    %65 = vmatprep.subr.mxu0 0.0
    %66 = vmatpush1.msra.mxu0 0.0
    %67 = vmatprep.subr.mxu0 0.0
    %68 = vmatpush1.msra.mxu0 0.0
    %69 = vmatprep.subr.mxu0 0.0
    %70 = vmatpush1.msra.mxu0 0.0
    %71 = vmatprep.subr.mxu0 0.0
    %72 = vmatpush1.msra.mxu0 0.0
    %73 = vmatprep.subr.mxu0 0.0
    %74 = vmatpush1.msra.mxu0 0.0
    %75 = vmatprep.subr.mxu0 0.0
    %76 = vmatpush1.msra.mxu0 0.0
    %77 = vmatprep.subr.mxu0 0.0
    %78 = vmatpush1.msra.mxu0 0.0
    %79 = vmatprep.subr.mxu0 0.0
    %80 = vmatpush1.msra.mxu0 %v43
    %81 = vmatprep.subr.mxu0 0.0
    %82 = vmatpush1.msra.mxu0 %v42
    %83 = vmatprep.subr.mxu0 0.0
    %84 = vmatpush1.msra.mxu0 %v41
    %85 = vmatprep.subr.mxu0 0.0
    %86 = vmatpush1.msra.mxu0 %v40
    %87 = vmatprep.subr.mxu0 0.0
    %88 = vmatpush2.msra.mxu0 0.0
    %89 = vmatprep.subr.mxu0 0.0
    %90 = vmatpush2.msra.mxu0 0.0
    %91 = vmatprep.subr.mxu0 0.0
    %92 = vmatpush2.msra.mxu0 0.0
    %93 = vmatprep.subr.mxu0 0.0
    %94 = vmatpush2.msra.mxu0 0.0
    %95 = vmatprep.subr.mxu0 0.0
    %96 = vmatpush2.msra.mxu0 0.0
    %97 = vmatprep.subr.mxu0 0.0
    %98 = vmatpush2.msra.mxu0 0.0
    %99 = vmatprep.subr.mxu0 0.0
    %100 = vmatpush2.msra.mxu0 0.0
    %101 = vmatprep.subr.mxu0 0.0
    %102 = vmatpush2.msra.mxu0 0.0
    %103 = vmatprep.subr.mxu0 0.0
    %104 = vmatpush2.msra.mxu0 0.0
    %105 = vmatprep.subr.mxu0 0.0
    %106 = vmatpush2.msra.mxu0 0.0
    %107 = vmatprep.subr.mxu0 0.0
    %108 = vmatpush2.msra.mxu0 0.0
    %109 = vmatprep.subr.mxu0 0.0
    %110 = vmatpush2.msra.mxu0 0.0
    %111 = vmatprep.subr.mxu0 0.0
    %112 = vmatpush2.msra.mxu0 0.0
    %113 = vmatprep.subr.mxu0 0.0
    %114 = vmatpush2.msra.mxu0 0.0
    %115 = vmatprep.subr.mxu0 0.0
    %116 = vmatpush2.msra.mxu0 0.0
    %117 = vmatprep.subr.mxu0 0.0
    %118 = vmatpush2.msra.mxu0 0.0
    %119 = vmatprep.mubr.f32.mxu0 0.0
    %120 = vmatmul.mubr.f32.gmra.mxu0 %v53
    %v121 = vpop.f32.mrf.mxu0
    %v122 = vadd.f32 %v49, %v121
    %v123 = vpop.f32.mrf.mxu0
    %124 = vdwg.mxu0
    %v125 = vld [vmem:[%s3] sm:$0xff]
    %v126 = vld [vmem:[%s3 + $0x8] sm:$0xff]
    %v127 = vld [vmem:[%s3 + $0x10] sm:$0xff]
    %v128 = vld [vmem:[%s3 + $0x18] sm:$0xff]
    %v130 = vsel %vm51, %v122, 0
    %132 = vmatprep.subr.mxu0 0.0
    %133 = vmatpush1.msra.mxu0 0.0
    %134 = vmatprep.subr.mxu0 0.0
    %135 = vmatpush1.msra.mxu0 0.0
    %136 = vmatprep.subr.mxu0 0.0
    %137 = vmatpush1.msra.mxu0 0.0
    %138 = vmatprep.subr.mxu0 0.0
    %139 = vmatpush1.msra.mxu0 0.0
    %140 = vmatprep.subr.mxu0 0.0
    %141 = vmatpush1.msra.mxu0 0.0
    %142 = vmatprep.subr.mxu0 0.0
    %143 = vmatpush1.msra.mxu0 0.0
    %144 = vmatprep.subr.mxu0 0.0
    %145 = vmatpush1.msra.mxu0 0.0
    %146 = vmatprep.subr.mxu0 0.0
    %147 = vmatpush1.msra.mxu0 0.0
    %148 = vmatprep.subr.mxu0 0.0
    %149 = vmatpush1.msra.mxu0 0.0
    %150 = vmatprep.subr.mxu0 0.0
    %151 = vmatpush1.msra.mxu0 0.0
    %152 = vmatprep.subr.mxu0 0.0
    %153 = vmatpush1.msra.mxu0 0.0
    %154 = vmatprep.subr.mxu0 0.0
    %155 = vmatpush1.msra.mxu0 0.0
    %156 = vmatprep.subr.mxu0 0.0
    %157 = vmatpush1.msra.mxu0 %v128
    %158 = vmatprep.subr.mxu0 0.0
    %159 = vmatpush1.msra.mxu0 %v127
    %160 = vmatprep.subr.mxu0 0.0
    %161 = vmatpush1.msra.mxu0 %v126
    %162 = vmatprep.subr.mxu0 0.0
    %163 = vmatpush1.msra.mxu0 %v125
    %164 = vmatprep.subr.mxu0 0.0
    %165 = vmatpush2.msra.mxu0 0.0
    %166 = vmatprep.subr.mxu0 0.0
    %167 = vmatpush2.msra.mxu0 0.0
    %168 = vmatprep.subr.mxu0 0.0
    %169 = vmatpush2.msra.mxu0 0.0
    %170 = vmatprep.subr.mxu0 0.0
    %171 = vmatpush2.msra.mxu0 0.0
    %172 = vmatprep.subr.mxu0 0.0
    %173 = vmatpush2.msra.mxu0 0.0
    %174 = vmatprep.subr.mxu0 0.0
    %175 = vmatpush2.msra.mxu0 0.0
    %176 = vmatprep.subr.mxu0 0.0
    %177 = vmatpush2.msra.mxu0 0.0
    %178 = vmatprep.subr.mxu0 0.0
    %179 = vmatpush2.msra.mxu0 0.0
    %180 = vmatprep.subr.mxu0 0.0
    %181 = vmatpush2.msra.mxu0 0.0
    %182 = vmatprep.subr.mxu0 0.0
    %183 = vmatpush2.msra.mxu0 0.0
    %184 = vmatprep.subr.mxu0 0.0
    %185 = vmatpush2.msra.mxu0 0.0
    %186 = vmatprep.subr.mxu0 0.0
    %187 = vmatpush2.msra.mxu0 0.0
    %188 = vmatprep.subr.mxu0 0.0
    %189 = vmatpush2.msra.mxu0 0.0
    %190 = vmatprep.subr.mxu0 0.0
    %191 = vmatpush2.msra.mxu0 0.0
    %192 = vmatprep.subr.mxu0 0.0
    %193 = vmatpush2.msra.mxu0 0.0
    %194 = vmatprep.subr.mxu0 0.0
    %195 = vmatpush2.msra.mxu0 0.0
    %196 = vmatprep.mubr.f32.mxu0 0.0
    %197 = vmatmul.mubr.f32.gmra.mxu0 %v130
    %v198 = vpop.f32.mrf.mxu0
    %v199 = vadd.f32 0.0, %v198
    %v200 = vpop.f32.mrf.mxu0
    %201 = vdwg.mxu0
    %v202 = vld [vmem:[%s0] sm:$0xf]
    %v203 = vld [vmem:[%s0 + $0x4] sm:$0xf]
    %v204 = vld [vmem:[%s0 + $0x8] sm:$0xf]
    %v205 = vld [vmem:[%s0 + $0xc] sm:$0xf]
    %v206 = vld [vmem:[%s0 + $0x10] sm:$0xf]
    %v207 = vld [vmem:[%s0 + $0x14] sm:$0xf]
    %v208 = vld [vmem:[%s0 + $0x18] sm:$0xf]
    %v209 = vld [vmem:[%s0 + $0x1c] sm:$0xf]
    %v210 = vunpack.c.l.bf16 %v202
    %v211 = vunpack.c.l.bf16 %v203
    %v212 = vunpack.c.l.bf16 %v204
    %v213 = vunpack.c.l.bf16 %v205
    %v214 = vunpack.c.l.bf16 %v206
    %v215 = vunpack.c.l.bf16 %v207
    %v216 = vunpack.c.l.bf16 %v208
    %v217 = vunpack.c.l.bf16 %v209
    %v219 = vcombine.high %v199, %v199
    %v221 = vunpack.c.l.s4 1966171168
    %v222 = vunpack.c.0.s8 %v221
    %v223 = vlaneseq
    %v224 = vshrl.u32 %v223, 7
    %v225 = vsub.s32 %v222, %v224
    %v226 = vrot.slane %v199, %v225
    %v228 = vunpack.c.l.s4 1966171168
    %v229 = vunpack.c.0.s8 %v228
    %v230 = vlaneseq
    %v231 = vshrl.u32 %v230, 7
    %v232 = vsub.s32 %v229, %v231
    %v233 = vrot.slane %v219, %v232
    %v234 = vcombine.high %v226, %v226
    %v235 = vcombine.high %v233, %v233
    %v237 = vunpack.c.l.s4 1966171168
    %v238 = vunpack.c.0.s8 %v237
    %v239 = vlaneseq
    %v240 = vshrl.u32 %v239, 7
    %v241 = vsub.s32 %v238, %v240
    %v242 = vrot.slane %v226, %v241
    %v244 = vunpack.c.l.s4 1966171168
    %v245 = vunpack.c.0.s8 %v244
    %v246 = vlaneseq
    %v247 = vshrl.u32 %v246, 7
    %v248 = vsub.s32 %v245, %v247
    %v249 = vrot.slane %v233, %v248
    %v251 = vunpack.c.l.s4 1966171168
    %v252 = vunpack.c.0.s8 %v251
    %v253 = vlaneseq
    %v254 = vshrl.u32 %v253, 7
    %v255 = vsub.s32 %v252, %v254
    %v256 = vrot.slane %v234, %v255
    %v258 = vunpack.c.l.s4 1966171168
    %v259 = vunpack.c.0.s8 %v258
    %v260 = vlaneseq
    %v261 = vshrl.u32 %v260, 7
    %v262 = vsub.s32 %v259, %v261
    %v263 = vrot.slane %v235, %v262
    %v264 = vcombine.high %v242, %v242
    %v265 = vcombine.high %v249, %v249
    %v266 = vcombine.high %v256, %v256
    %v267 = vcombine.high %v263, %v263
    %v268 = vlaneseq
    %v269 = vshrl.u32 %v268, 7
    %v270 = vsub.s32 0, %v269
    %v271 = vrot.slane %v242, %v270
    %v272 = vlaneseq
    %v273 = vshrl.u32 %v272, 7
    %v274 = vsub.s32 0, %v273
    %v275 = vrot.slane %v256, %v274
    %v276 = vlaneseq
    %v277 = vshrl.u32 %v276, 7
    %v278 = vsub.s32 0, %v277
    %v279 = vrot.slane %v264, %v278
    %v280 = vlaneseq
    %v281 = vshrl.u32 %v280, 7
    %v282 = vsub.s32 0, %v281
    %v283 = vrot.slane %v266, %v282
    %v284 = vlaneseq
    %v285 = vshrl.u32 %v284, 7
    %v286 = vsub.s32 0, %v285
    %v287 = vrot.slane %v249, %v286
    %v288 = vlaneseq
    %v289 = vshrl.u32 %v288, 7
    %v290 = vsub.s32 0, %v289
    %v291 = vrot.slane %v263, %v290
    %v292 = vlaneseq
    %v293 = vshrl.u32 %v292, 7
    %v294 = vsub.s32 0, %v293
    %v295 = vrot.slane %v265, %v294
    %v296 = vlaneseq
    %v297 = vshrl.u32 %v296, 7
    %v298 = vsub.s32 0, %v297
    %v299 = vrot.slane %v267, %v298
    %v308 = vmul.f32 %v210, %v271
    %v309 = vmul.f32 %v211, %v275
    %v310 = vmul.f32 %v212, %v279
    %v311 = vmul.f32 %v213, %v283
    %v312 = vmul.f32 %v214, %v287
    %v313 = vmul.f32 %v215, %v291
    %v314 = vmul.f32 %v216, %v295
    %v315 = vmul.f32 %v217, %v299
    %vm316 = vcmask 130048
    %v317 = vsel %vm316, %v308, 0.0
    %318 = vadd.xlane.f32.xlu0 %v317
    %v319 = vpop.xlane.xlu0 %318
    %v320 = vsel %vm316, %v309, 0.0
    %321 = vadd.xlane.f32.xlu0 %v320
    %v322 = vpop.xlane.xlu0 %321
    %v323 = vsel %vm316, %v310, 0.0
    %324 = vadd.xlane.f32.xlu0 %v323
    %v325 = vpop.xlane.xlu0 %324
    %v326 = vsel %vm316, %v311, 0.0
    %327 = vadd.xlane.f32.xlu0 %v326
    %v328 = vpop.xlane.xlu0 %327
    %v329 = vsel %vm316, %v312, 0.0
    %330 = vadd.xlane.f32.xlu0 %v329
    %v331 = vpop.xlane.xlu0 %330
    %v332 = vsel %vm316, %v313, 0.0
    %333 = vadd.xlane.f32.xlu0 %v332
    %v334 = vpop.xlane.xlu0 %333
    %v335 = vsel %vm316, %v314, 0.0
    %336 = vadd.xlane.f32.xlu0 %v335
    %v337 = vpop.xlane.xlu0 %336
    %v338 = vsel %vm316, %v315, 0.0
    %339 = vadd.xlane.f32.xlu0 %v338
    %v340 = vpop.xlane.xlu0 %339
    %v349 = vlaneseq
    %v350 = vand.u32 %v349, 127
    %v351 = vlaneseq
    %v352 = vshrl.u32 %v351, 7
    %v353 = vsub.s32 %v350, %v352
    %v354 = vrot.slane %v319, %v353
    %v355 = vlaneseq
    %v356 = vshrl.u32 %v355, 7
    %v357 = vsub.s32 %v350, %v356
    %v358 = vrot.slane %v322, %v357
    %v359 = vlaneseq
    %v360 = vshrl.u32 %v359, 7
    %v361 = vsub.s32 %v350, %v360
    %v362 = vrot.slane %v325, %v361
    %v363 = vlaneseq
    %v364 = vshrl.u32 %v363, 7
    %v365 = vsub.s32 %v350, %v364
    %v366 = vrot.slane %v328, %v365
    %v367 = vlaneseq
    %v368 = vshrl.u32 %v367, 7
    %v369 = vsub.s32 %v350, %v368
    %v370 = vrot.slane %v331, %v369
    %v371 = vlaneseq
    %v372 = vshrl.u32 %v371, 7
    %v373 = vsub.s32 %v350, %v372
    %v374 = vrot.slane %v334, %v373
    %v375 = vlaneseq
    %v376 = vshrl.u32 %v375, 7
    %v377 = vsub.s32 %v350, %v376
    %v378 = vrot.slane %v337, %v377
    %v379 = vlaneseq
    %v380 = vshrl.u32 %v379, 7
    %v381 = vsub.s32 %v350, %v380
    %v382 = vrot.slane %v340, %v381
    %vm383 = vcmask 1041409
    %v384 = vsel %vm383, %v358, %v354
    %vm385 = vcmask 1042434
    %v386 = vsel %vm385, %v362, %v384
    %vm387 = vcmask 1043459
    %v388 = vsel %vm387, %v366, %v386
    %vm389 = vcmask 1044484
    %v390 = vsel %vm389, %v370, %v388
    %vm391 = vcmask 1045509
    %v392 = vsel %vm391, %v374, %v390
    %vm393 = vcmask 1046534
    %v394 = vsel %vm393, %v378, %v392
    %vm395 = vcmask 1047559
    %v396 = vsel %vm395, %v382, %v394
    %vm398 = vcmask 64512
    %v399 = vsel %vm398, %v396, -inf
    %400 = vmax.xlane.f32.xlu0 %v399
    %v401 = vpop.xlane.xlu0 %400
    %v403 = vlaneseq
    %v404 = vshrl.u32 %v403, 7
    %v405 = vsub.s32 0, %v404
    %v406 = vrot.slane %v401, %v405
    %v407 = vlaneseq
    %v408 = vshrl.u32 %v407, 7
    %v409 = vsub.s32 1, %v408
    %v410 = vrot.slane %v401, %v409
    %v411 = vlaneseq
    %v412 = vshrl.u32 %v411, 7
    %v413 = vsub.s32 2, %v412
    %v414 = vrot.slane %v401, %v413
    %v415 = vlaneseq
    %v416 = vshrl.u32 %v415, 7
    %v417 = vsub.s32 3, %v416
    %v418 = vrot.slane %v401, %v417
    %v419 = vlaneseq
    %v420 = vshrl.u32 %v419, 7
    %v421 = vsub.s32 4, %v420
    %v422 = vrot.slane %v401, %v421
    %v423 = vlaneseq
    %v424 = vshrl.u32 %v423, 7
    %v425 = vsub.s32 5, %v424
    %v426 = vrot.slane %v401, %v425
    %v427 = vlaneseq
    %v428 = vshrl.u32 %v427, 7
    %v429 = vsub.s32 6, %v428
    %v430 = vrot.slane %v401, %v429
    %v431 = vlaneseq
    %v432 = vshrl.u32 %v431, 7
    %v433 = vsub.s32 7, %v432
    %v434 = vrot.slane %v401, %v433
    %v443 = vsub.f32 %v319, %v406
    %v444 = vsub.f32 %v322, %v410
    %v445 = vsub.f32 %v325, %v414
    %v446 = vsub.f32 %v328, %v418
    %v447 = vsub.f32 %v331, %v422
    %v448 = vsub.f32 %v334, %v426
    %v449 = vsub.f32 %v337, %v430
    %v450 = vsub.f32 %v340, %v434
    %v451 = vmul.f32 %v443, 1.442695
    %v452 = vpow.pop %v451
    %v453 = vmul.f32 %v444, 1.442695
    %v454 = vpow.pop %v453
    %v455 = vmul.f32 %v445, 1.442695
    %v456 = vpow.pop %v455
    %v457 = vmul.f32 %v446, 1.442695
    %v458 = vpow.pop %v457
    %v459 = vmul.f32 %v447, 1.442695
    %v460 = vpow.pop %v459
    %v461 = vmul.f32 %v448, 1.442695
    %v462 = vpow.pop %v461
    %v463 = vmul.f32 %v449, 1.442695
    %v464 = vpow.pop %v463
    %v465 = vmul.f32 %v450, 1.442695
    %v466 = vpow.pop %v465
    %475 = vset.pattern.permute.xlu0 0
    %476 = vperm.xlu0 %475, %v452
    %v477 = vpop.permute.xlu0 %476
    %478 = vset.pattern.permute.xlu0 0
    %479 = vperm.xlu0 %478, %v454
    %v480 = vpop.permute.xlu0 %479
    %481 = vset.pattern.permute.xlu0 0
    %482 = vperm.xlu0 %481, %v456
    %v483 = vpop.permute.xlu0 %482
    %484 = vset.pattern.permute.xlu0 0
    %485 = vperm.xlu0 %484, %v458
    %v486 = vpop.permute.xlu0 %485
    %487 = vset.pattern.permute.xlu0 0
    %488 = vperm.xlu0 %487, %v460
    %v489 = vpop.permute.xlu0 %488
    %490 = vset.pattern.permute.xlu0 0
    %491 = vperm.xlu0 %490, %v462
    %v492 = vpop.permute.xlu0 %491
    %493 = vset.pattern.permute.xlu0 0
    %494 = vperm.xlu0 %493, %v464
    %v495 = vpop.permute.xlu0 %494
    %496 = vset.pattern.permute.xlu0 0
    %497 = vperm.xlu0 %496, %v466
    %v498 = vpop.permute.xlu0 %497
    %v499 = vlaneseq
    %v500 = vshrl.u32 %v499, 7
    %v501 = vsub.s32 %v350, %v500
    %v502 = vrot.slane %v477, %v501
    %v503 = vlaneseq
    %v504 = vshrl.u32 %v503, 7
    %v505 = vsub.s32 %v350, %v504
    %v506 = vrot.slane %v480, %v505
    %v507 = vlaneseq
    %v508 = vshrl.u32 %v507, 7
    %v509 = vsub.s32 %v350, %v508
    %v510 = vrot.slane %v483, %v509
    %v511 = vlaneseq
    %v512 = vshrl.u32 %v511, 7
    %v513 = vsub.s32 %v350, %v512
    %v514 = vrot.slane %v486, %v513
    %v515 = vlaneseq
    %v516 = vshrl.u32 %v515, 7
    %v517 = vsub.s32 %v350, %v516
    %v518 = vrot.slane %v489, %v517
    %v519 = vlaneseq
    %v520 = vshrl.u32 %v519, 7
    %v521 = vsub.s32 %v350, %v520
    %v522 = vrot.slane %v492, %v521
    %v523 = vlaneseq
    %v524 = vshrl.u32 %v523, 7
    %v525 = vsub.s32 %v350, %v524
    %v526 = vrot.slane %v495, %v525
    %v527 = vlaneseq
    %v528 = vshrl.u32 %v527, 7
    %v529 = vsub.s32 %v350, %v528
    %v530 = vrot.slane %v498, %v529
    %v531 = vsel %vm383, %v506, %v502
    %v532 = vsel %vm385, %v510, %v531
    %v533 = vsel %vm387, %v514, %v532
    %v534 = vsel %vm389, %v518, %v533
    %v535 = vsel %vm391, %v522, %v534
    %v536 = vsel %vm393, %v526, %v535
    %v537 = vsel %vm395, %v530, %v536
    %v539 = vsel %vm398, %v537, 0.0
    %540 = vadd.xlane.f32.xlu0 %v539
    %v541 = vpop.xlane.xlu0 %540
    %v542 = vlog2.pop %v541
    %v543 = vmul.f32 %v542, 0.6931472
    %v545 = vlaneseq
    %v546 = vshrl.u32 %v545, 7
    %v547 = vsub.s32 0, %v546
    %v548 = vrot.slane %v543, %v547
    %v549 = vlaneseq
    %v550 = vshrl.u32 %v549, 7
    %v551 = vsub.s32 1, %v550
    %v552 = vrot.slane %v543, %v551
    %v553 = vlaneseq
    %v554 = vshrl.u32 %v553, 7
    %v555 = vsub.s32 2, %v554
    %v556 = vrot.slane %v543, %v555
    %v557 = vlaneseq
    %v558 = vshrl.u32 %v557, 7
    %v559 = vsub.s32 3, %v558
    %v560 = vrot.slane %v543, %v559
    %v561 = vlaneseq
    %v562 = vshrl.u32 %v561, 7
    %v563 = vsub.s32 4, %v562
    %v564 = vrot.slane %v543, %v563
    %v565 = vlaneseq
    %v566 = vshrl.u32 %v565, 7
    %v567 = vsub.s32 5, %v566
    %v568 = vrot.slane %v543, %v567
    %v569 = vlaneseq
    %v570 = vshrl.u32 %v569, 7
    %v571 = vsub.s32 6, %v570
    %v572 = vrot.slane %v543, %v571
    %v573 = vlaneseq
    %v574 = vshrl.u32 %v573, 7
    %v575 = vsub.s32 7, %v574
    %v576 = vrot.slane %v543, %v575
    %v585 = vsub.f32 %v443, %v548
    %v586 = vsub.f32 %v444, %v552
    %v587 = vsub.f32 %v445, %v556
    %v588 = vsub.f32 %v446, %v560
    %v589 = vsub.f32 %v447, %v564
    %v590 = vsub.f32 %v448, %v568
    %v591 = vsub.f32 %v449, %v572
    %v592 = vsub.f32 %v450, %v576
    %v593 = vld [vmem:[%s2] sm:$0xff]
    %v594 = vsub.f32 1.0, %v593
    %v595 = vmul.f32 %v594, 100000.0
    %v597 = vlaneseq
    %v598 = vshrl.u32 %v597, 7
    %v599 = vsub.s32 0, %v598
    %v600 = vrot.slane %v595, %v599
    %602 = vbcast.lane.b32.xlu0 %v600, 256
    %v603 = vpop.permute.xlu0 %602
    %v604 = vlaneseq
    %v605 = vshrl.u32 %v604, 7
    %v606 = vsub.s32 1, %v605
    %v607 = vrot.slane %v595, %v606
    %609 = vbcast.lane.b32.xlu0 %v607, 256
    %v610 = vpop.permute.xlu0 %609
    %v611 = vlaneseq
    %v612 = vshrl.u32 %v611, 7
    %v613 = vsub.s32 2, %v612
    %v614 = vrot.slane %v595, %v613
    %616 = vbcast.lane.b32.xlu0 %v614, 256
    %v617 = vpop.permute.xlu0 %616
    %v618 = vlaneseq
    %v619 = vshrl.u32 %v618, 7
    %v620 = vsub.s32 3, %v619
    %v621 = vrot.slane %v595, %v620
    %623 = vbcast.lane.b32.xlu0 %v621, 256
    %v624 = vpop.permute.xlu0 %623
    %v625 = vlaneseq
    %v626 = vshrl.u32 %v625, 7
    %v627 = vsub.s32 4, %v626
    %v628 = vrot.slane %v595, %v627
    %630 = vbcast.lane.b32.xlu0 %v628, 256
    %v631 = vpop.permute.xlu0 %630
    %v632 = vlaneseq
    %v633 = vshrl.u32 %v632, 7
    %v634 = vsub.s32 5, %v633
    %v635 = vrot.slane %v595, %v634
    %637 = vbcast.lane.b32.xlu0 %v635, 256
    %v638 = vpop.permute.xlu0 %637
    %v639 = vlaneseq
    %v640 = vshrl.u32 %v639, 7
    %v641 = vsub.s32 6, %v640
    %v642 = vrot.slane %v595, %v641
    %644 = vbcast.lane.b32.xlu0 %v642, 256
    %v645 = vpop.permute.xlu0 %644
    %v646 = vlaneseq
    %v647 = vshrl.u32 %v646, 7
    %v648 = vsub.s32 7, %v647
    %v649 = vrot.slane %v595, %v648
    %651 = vbcast.lane.b32.xlu0 %v649, 256
    %v652 = vpop.permute.xlu0 %651
    %v661 = vsub.f32 %v585, %v603
    %v662 = vsub.f32 %v586, %v610
    %v663 = vsub.f32 %v587, %v617
    %v664 = vsub.f32 %v588, %v624
    %v665 = vsub.f32 %v589, %v631
    %v666 = vsub.f32 %v590, %v638
    %v667 = vsub.f32 %v591, %v645
    %v668 = vsub.f32 %v592, %v652
    %677 = vset.pattern.permute.xlu0 0
    %678 = vperm.xlu0 %677, %v661
    %v679 = vpop.permute.xlu0 %678
    %680 = vset.pattern.permute.xlu0 0
    %681 = vperm.xlu0 %680, %v662
    %v682 = vpop.permute.xlu0 %681
    %683 = vset.pattern.permute.xlu0 0
    %684 = vperm.xlu0 %683, %v663
    %v685 = vpop.permute.xlu0 %684
    %686 = vset.pattern.permute.xlu0 0
    %687 = vperm.xlu0 %686, %v664
    %v688 = vpop.permute.xlu0 %687
    %689 = vset.pattern.permute.xlu0 0
    %690 = vperm.xlu0 %689, %v665
    %v691 = vpop.permute.xlu0 %690
    %692 = vset.pattern.permute.xlu0 0
    %693 = vperm.xlu0 %692, %v666
    %v694 = vpop.permute.xlu0 %693
    %695 = vset.pattern.permute.xlu0 0
    %696 = vperm.xlu0 %695, %v667
    %v697 = vpop.permute.xlu0 %696
    %698 = vset.pattern.permute.xlu0 0
    %699 = vperm.xlu0 %698, %v668
    %v700 = vpop.permute.xlu0 %699
    %v701 = vlaneseq
    %v702 = vshrl.u32 %v701, 7
    %v703 = vsub.s32 %v350, %v702
    %v704 = vrot.slane %v679, %v703
    %v705 = vlaneseq
    %v706 = vshrl.u32 %v705, 7
    %v707 = vsub.s32 %v350, %v706
    %v708 = vrot.slane %v682, %v707
    %v709 = vlaneseq
    %v710 = vshrl.u32 %v709, 7
    %v711 = vsub.s32 %v350, %v710
    %v712 = vrot.slane %v685, %v711
    %v713 = vlaneseq
    %v714 = vshrl.u32 %v713, 7
    %v715 = vsub.s32 %v350, %v714
    %v716 = vrot.slane %v688, %v715
    %v717 = vlaneseq
    %v718 = vshrl.u32 %v717, 7
    %v719 = vsub.s32 %v350, %v718
    %v720 = vrot.slane %v691, %v719
    %v721 = vlaneseq
    %v722 = vshrl.u32 %v721, 7
    %v723 = vsub.s32 %v350, %v722
    %v724 = vrot.slane %v694, %v723
    %v725 = vlaneseq
    %v726 = vshrl.u32 %v725, 7
    %v727 = vsub.s32 %v350, %v726
    %v728 = vrot.slane %v697, %v727
    %v729 = vlaneseq
    %v730 = vshrl.u32 %v729, 7
    %v731 = vsub.s32 %v350, %v730
    %v732 = vrot.slane %v700, %v731
    %v733 = vsel %vm383, %v708, %v704
    %v734 = vsel %vm385, %v712, %v733
    %v735 = vsel %vm387, %v716, %v734
    %v736 = vsel %vm389, %v720, %v735
    %v737 = vsel %vm391, %v724, %v736
    %v738 = vsel %vm393, %v728, %v737
    %v739 = vsel %vm395, %v732, %v738
    %741 = vxpose.xlu0.b32.start [1/16] %v739, 128
    %742 = vxpose.xlu0.b32.cont [2/16] 0.0, 128
    %743 = vxpose.xlu0.b32.cont [3/16] 0.0, 128
    %744 = vxpose.xlu0.b32.cont [4/16] 0.0, 128
    %745 = vxpose.xlu0.b32.cont [5/16] 0.0, 128
    %746 = vxpose.xlu0.b32.cont [6/16] 0.0, 128
    %747 = vxpose.xlu0.b32.cont [7/16] 0.0, 128
    %748 = vxpose.xlu0.b32.cont [8/16] 0.0, 128
    %749 = vxpose.xlu0.b32.cont [9/16] 0.0, 128
    %750 = vxpose.xlu0.b32.cont [10/16] 0.0, 128
    %751 = vxpose.xlu0.b32.cont [11/16] 0.0, 128
    %752 = vxpose.xlu0.b32.cont [12/16] 0.0, 128
    %753 = vxpose.xlu0.b32.cont [13/16] 0.0, 128
    %754 = vxpose.xlu0.b32.cont [14/16] 0.0, 128
    %755 = vxpose.xlu0.b32.cont [15/16] 0.0, 128
    %756 = vxpose.xlu0.b32.end [16/16] 0.0, 128
    %v757 = vpop.trf.xlu0
    %v758 = vpop.trf.xlu0
    %v759 = vpop.trf.xlu0
    %v760 = vpop.trf.xlu0
    %v761 = vpop.trf.xlu0
    %v762 = vpop.trf.xlu0
    %v763 = vpop.trf.xlu0
    %v764 = vpop.trf.xlu0
    %v765 = vpop.trf.xlu0
    %v766 = vpop.trf.xlu0
    %v767 = vpop.trf.xlu0
    %v768 = vpop.trf.xlu0
    %v769 = vpop.trf.xlu0
    %v770 = vpop.trf.xlu0
    %v771 = vpop.trf.xlu0
    %v772 = vpop.trf.xlu0
    %773 = vst.msk [vmem:[#allocation5] sm:$0xff] %vm398, %v757
    // Predicated region
    $region30: #{tpu_custom_call.1} parent=1 // pred_check
      _
    $region31: #{tpu_custom_call.1} parent=1 // pred_check_branch
      %775 = sbr.rel (0) target = $region33
    $region32: #{tpu_custom_call.1} parent=1 // pred_region
      %s777 = ssub.s32 128, 128
      %778 = vsyncadd [#allocation4], %s777
      %s780 = sshll.u32 [#allocation5], 4
      %s781 = int_to_ptr.vmem [resolvable:$true] %s780
      %783 = dma.vmem_to_hbm [thread:$0]  %s781, 128, %s6, [#allocation4]
    $region33: #{tpu_custom_call.1} parent=1 // pred_fallthru
      _
    // Predicated region
    $region34: #{tpu_custom_call.1} parent=1 // pred_check
      _
    $region35: #{tpu_custom_call.1} parent=1 // pred_check_branch
      %785 = sbr.rel (0) target = $region37
    $region36: #{tpu_custom_call.1} parent=1 // pred_region
      %786 = dma.done [#allocation4], 128
    $region37: #{tpu_custom_call.1} parent=1 // pred_fallthru
      _
    %787 = vsyncpa [#allocation3], 1
    %788 = vsyncpa [#allocation4], 1

</llo_original>
